<compile_context>
chip_gen: v6e
topology: v6e:2x2x1
jax: 0.10.0
libtpu: 0.0.40
codegen_flags: <defaults>
</compile_context>

<pallas_src>
import jax
import jax.numpy as jnp
from jax.experimental import pallas as pl
from jax.experimental.pallas import tpu as pltpu

HIDDEN_LAYER = 50
N_STATES = 4       # synthetic small env: state dim (CartPole-like)
N_ACTIONS = 2      # synthetic small env: action dim
BATCH = 2

# Padded dims for the transposed (batch-on-lanes) layout.
S_PAD = 8          # state dim  -> sublane axis of x^T (fc1 contraction K)
H_PAD = 56         # hidden dim -> sublane axis of h^T (50 -> next multiple of 8)
A_PAD = 8          # action dim -> sublane axis of y^T (2  -> next multiple of 8)


def _round_up(n, m):
    return ((n + m - 1) // m) * m


def pack_params(w1, b1, w2, b2):
    """Zero-pad PyTorch-convention params (W:(out,in)) into kernel-ready shapes.

    Returns (w1p, b1p, w2p, b2p) with shapes (H_PAD,S_PAD), (H_PAD,1),
    (A_PAD,H_PAD), (A_PAD,1).  Zero padding is mathematically inert: padded
    hidden rows see bias 0 -> tanh(0)=0 and the matching W2 columns are zero;
    padded action rows are zero and are sliced off in the wrapper.
    """
    w1 = jnp.asarray(w1, jnp.float32)
    b1 = jnp.asarray(b1, jnp.float32).reshape(-1)
    w2 = jnp.asarray(w2, jnp.float32)
    b2 = jnp.asarray(b2, jnp.float32).reshape(-1)
    H, S = w1.shape
    A = w2.shape[0]
    assert S <= S_PAD and H <= H_PAD and A <= A_PAD
    w1p = jnp.zeros((H_PAD, S_PAD), jnp.float32).at[:H, :S].set(w1)
    b1p = jnp.zeros((H_PAD, 1), jnp.float32).at[:H, 0].set(b1)
    w2p = jnp.zeros((A_PAD, H_PAD), jnp.float32).at[:A, :H].set(w2)
    b2p = jnp.zeros((A_PAD, 1), jnp.float32).at[:A, 0].set(b2)
    return w1p, b1p, w2p, b2p


def net_kernel(xt_ref, w1_ref, b1_ref, w2_ref, b2_ref, out_ref):
    # xt: (S_PAD, bm) block of x^T; params are whole, VMEM-resident, exactly
    # the shapes the MXU needs (no in-kernel transposes or slices).
    xt = xt_ref[...]
    # fc1 + tanh (EUP) + out, fused. Batch stays on the 128-lane axis, so both
    # matmul results and the output store are lane-dense, and only A_PAD=8 rows
    # of output traffic ever reach HBM.
    h = jnp.tanh(
        jnp.dot(w1_ref[...], xt, preferred_element_type=jnp.float32) + b1_ref[...])
    y = jnp.dot(w2_ref[...], h, preferred_element_type=jnp.float32) + b2_ref[...]
    out_ref[...] = y.astype(out_ref.dtype)


_PARAM_SPEC = pl.BlockSpec(memory_space=pltpu.MemorySpace.VMEM)  # untiled, resident


def _net_forward_impl(x, params, n_actions, block_b):
    """x: (B, N_STATES) fp32 -> (B, n_actions) fp32."""
    w1p, b1p, w2p, b2p = params
    B, S = x.shape
    assert S <= S_PAD

    # Batch (lane) blocking.
    b128 = _round_up(max(B, 1), 128)
    if 256 < b128 <= block_b:
        # Would fit in one block: split in two so v7x's second TensorCore gets
        # work (no-op on single-TC v5e/v6e).
        bm = _round_up(-(-b128 // 2), 128)
    else:
        bm = min(block_b, b128)
    b_pad = _round_up(b128, bm)
    grid_b = b_pad // bm

    # Layout plumbing (fused under jit): batch-on-lanes transpose, zero-pad
    # state rows and batch lanes (padding is inert, sliced off below).
    xt = jnp.zeros((S_PAD, b_pad), jnp.float32)
    xt = xt.at[:S, :B].set(jnp.asarray(x, jnp.float32).T)

    if grid_b == 1:
        # Latency path: single fused invocation, no grid -> no per-step
        # pipeline bookkeeping; everything resident in VMEM.
        yt = pl.pallas_call(
            net_kernel,
            out_shape=jax.ShapeDtypeStruct((A_PAD, b_pad), jnp.float32),
            in_specs=[_PARAM_SPEC] * 5,          # x^T + 4 params, all in VMEM
            out_specs=pl.BlockSpec(memory_space=pltpu.MemorySpace.VMEM),
        )(xt, w1p, b1p, w2p, b2p)
    else:
        # Throughput path: block the batch (lane) axis; params stay VMEM
        # resident across all grid steps (untiled specs -> single load).
        yt = pl.pallas_call(
            net_kernel,
            out_shape=jax.ShapeDtypeStruct((A_PAD, b_pad), jnp.float32),
            grid=(grid_b,),
            in_specs=[
                pl.BlockSpec((S_PAD, bm), lambda i: (0, i)),   # x^T, lane-blocked
                _PARAM_SPEC, _PARAM_SPEC, _PARAM_SPEC, _PARAM_SPEC,
            ],
            out_specs=pl.BlockSpec((A_PAD, bm), lambda i: (0, i)),
            compiler_params=pltpu.CompilerParams(
                dimension_semantics=("parallel",)),
        )(xt, w1p, b1p, w2p, b2p)

    return yt[:n_actions, :B].T


# One jitted executable per (batch shape, n_actions, block_b): fuses the pad,
# transpose, kernel and output slice into a single dispatch.
net_forward = jax.jit(_net_forward_impl, static_argnames=("n_actions", "block_b"))


def init_params(key):
    k1, k2, k3, k4 = jax.random.split(key, 4)
    # Matches module __init__: weights ~ N(0, 0.1); small random biases.
    w1 = 0.1 * jax.random.normal(k1, (HIDDEN_LAYER, N_STATES), dtype=jnp.float32)
    b1 = 0.1 * jax.random.normal(k2, (HIDDEN_LAYER,), dtype=jnp.float32)
    w2 = 0.1 * jax.random.normal(k3, (N_ACTIONS, HIDDEN_LAYER), dtype=jnp.float32)
    b2 = 0.1 * jax.random.normal(k4, (N_ACTIONS,), dtype=jnp.float32)
    return w1, b1, w2, b2


def reference_forward(x, w1, b1, w2, b2):
    h = jnp.tanh(x @ w1.T + b1[None, :])
    return h @ w2.T + b2[None, :]


if __name__ == "__main__":
    key = jax.random.PRNGKey(0)
    kx, kp, kb = jax.random.split(key, 3)
    w1, b1, w2, b2 = init_params(kp)
    params = pack_params(w1, b1, w2, b2)     # packed once, reused per call

    # Small-batch / action-selection path (B=2): single jitted dispatch, no grid.
    x = jax.random.normal(kx, (BATCH, N_STATES), dtype=jnp.float32)
    actions_value = jax.block_until_ready(
        net_forward(x, params, n_actions=N_ACTIONS, block_b=4096))
    ref = reference_forward(x, w1, b1, w2, b2)
    assert actions_value.shape == (BATCH, N_ACTIONS)
    assert jnp.allclose(actions_value, ref, atol=2e-5, rtol=2e-5)

    # Batched / replay-buffer path (B=512): exercises the gridded, parallel
    # batch axis (two 256-lane blocks -> both v7x TensorCores busy).
    xb = jax.random.normal(kb, (512, N_STATES), dtype=jnp.float32)
    out_b = jax.block_until_ready(
        net_forward(xb, params, n_actions=N_ACTIONS, block_b=4096))
    ref_b = reference_forward(xb, w1, b1, w2, b2)
    assert out_b.shape == (512, N_ACTIONS)
    assert jnp.allclose(out_b, ref_b, atol=2e-5, rtol=2e-5)

    print("KERNEL_OK")
</pallas_src>

<mosaic_0001>
module attributes {stable_mosaic.version = 11 : i64} {
  func.func @net_kernel(%arg0: memref<8x128xf32, #tpu.memory_space<vmem>>, %arg1: memref<56x8xf32, #tpu.memory_space<vmem>>, %arg2: memref<56x1xf32, #tpu.memory_space<vmem>>, %arg3: memref<8x56xf32, #tpu.memory_space<vmem>>, %arg4: memref<8x1xf32, #tpu.memory_space<vmem>>, %arg5: memref<8x128xf32, #tpu.memory_space<vmem>>) attributes {dimension_semantics = [], scalar_prefetch = 0 : i64, scratch_operands = 0 : i64, tpu.core_type = #tpu.core_type<tc>} {
    %c0 = arith.constant 0 : index
    %c0_0 = arith.constant 0 : index
    %0 = vector.load %arg0[%c0, %c0_0] : memref<8x128xf32, #tpu.memory_space<vmem>>, vector<8x128xf32>
    %c0_1 = arith.constant 0 : index
    %c0_2 = arith.constant 0 : index
    %1 = vector.load %arg1[%c0_1, %c0_2] : memref<56x8xf32, #tpu.memory_space<vmem>>, vector<56x8xf32>
    %cst = arith.constant dense<0.000000e+00> : vector<56x128xf32>
    %2 = tpu.matmul %1, %0, %cst {dimension_numbers = #tpu.dot_dimension_numbers<[1], [0], [0], [1], [0, 0, 1, 1], [], []>} : vector<56x8xf32>, vector<8x128xf32>, vector<56x128xf32> -> vector<56x128xf32>
    %c0_3 = arith.constant 0 : index
    %c0_4 = arith.constant 0 : index
    %3 = vector.load %arg2[%c0_3, %c0_4] : memref<56x1xf32, #tpu.memory_space<vmem>>, vector<56x1xf32>
    %4 = vector.broadcast %3 : vector<56x1xf32> to vector<56x128xf32>
    %5 = arith.addf %2, %4 : vector<56x128xf32>
    %6 = math.tanh %5 : vector<56x128xf32>
    %c0_5 = arith.constant 0 : index
    %c0_6 = arith.constant 0 : index
    %7 = vector.load %arg3[%c0_5, %c0_6] : memref<8x56xf32, #tpu.memory_space<vmem>>, vector<8x56xf32>
    %cst_7 = arith.constant dense<0.000000e+00> : vector<8x128xf32>
    %8 = tpu.matmul %7, %6, %cst_7 {dimension_numbers = #tpu.dot_dimension_numbers<[1], [0], [0], [1], [0, 0, 1, 1], [], []>} : vector<8x56xf32>, vector<56x128xf32>, vector<8x128xf32> -> vector<8x128xf32>
    %c0_8 = arith.constant 0 : index
    %c0_9 = arith.constant 0 : index
    %9 = vector.load %arg4[%c0_8, %c0_9] : memref<8x1xf32, #tpu.memory_space<vmem>>, vector<8x1xf32>
    %10 = vector.broadcast %9 : vector<8x1xf32> to vector<8x128xf32>
    %11 = arith.addf %8, %10 : vector<8x128xf32>
    %c0_10 = arith.constant 0 : index
    %c0_11 = arith.constant 0 : index
    %12 = vector.load %arg5[%c0_10, %c0_11] : memref<8x128xf32, #tpu.memory_space<vmem>>, vector<8x128xf32>
    tpu.vector_store %arg5[%c0_10, %c0_11], %11 {strides = array<i32>} : memref<8x128xf32, #tpu.memory_space<vmem>>, vector<8x128xf32>,
    return
  }
}

</mosaic_0001>

<llo_original>
// kernel: _net_forward_impl.1
$region0: #{_net_forward_impl.1}
  #allocation0 [shape = 'u32[]', space=smem, size = 0x4, offset = 0x4, fixed_abs, tag = 'smem constant byte address 0x4 - core index']
  #allocation1 [shape = 'u32[144,128]{1,0:T(1,128)}', space=vmem, size = 0x12000, scoped, tag = 'internal scratch']
  %s0 = inlined_call_operand.vmem [shape: f32[8,128], index: 0, kind: input, shape index: {}]
  %s1 = inlined_call_operand.vmem [shape: f32[56,8], index: 1, kind: input, shape index: {}]
  %s2 = inlined_call_operand.vmem [shape: f32[56,1], index: 2, kind: input, shape index: {}]
  %s3 = inlined_call_operand.vmem [shape: f32[8,56], index: 3, kind: input, shape index: {}]
  %s4 = inlined_call_operand.vmem [shape: f32[8,1], index: 4, kind: input, shape index: {}]
  %s5 = inlined_call_operand.vmem [shape: f32[8,128], index: 5, kind: output, shape index: {}]
  %s6 = sld [smem:[#allocation0]]
  $region30: #{_net_forward_impl.1} parent=0
    _
  %s8 = ssub.s32 1, %s6
  %s9 = scalar_select 0, %s8, %s6
  // Predicated region
  $region2: #{_net_forward_impl.1} parent=0 // pred_check
    _
  $region3: #{_net_forward_impl.1} parent=0 // pred_check_branch
    %11 = sbr.rel (0) target = $region5
  $region4: #{_net_forward_impl.1} parent=0 // pred_region
    _
  $region5: #{_net_forward_impl.1} parent=0 // pred_fallthru
    _
  // Predicated region
  $region6: #{_net_forward_impl.1} parent=0 // pred_check
    _
  $region7: #{_net_forward_impl.1} parent=0 // pred_check_branch
    %13 = sbr.rel (0) target = $region9
  $region8: #{_net_forward_impl.1} parent=0 // pred_region
    _
  $region9: #{_net_forward_impl.1} parent=0 // pred_fallthru
    _
  // Predicated region
  $region10: #{_net_forward_impl.1} parent=0 // pred_check
    _
  $region11: #{_net_forward_impl.1} parent=0 // pred_check_branch
    %15 = sbr.rel (0) target = $region13
  $region12: #{_net_forward_impl.1} parent=0 // pred_region
    _
  $region13: #{_net_forward_impl.1} parent=0 // pred_fallthru
    _
  // Predicated region
  $region14: #{_net_forward_impl.1} parent=0 // pred_check
    _
  $region15: #{_net_forward_impl.1} parent=0 // pred_check_branch
    %17 = sbr.rel (0) target = $region17
  $region16: #{_net_forward_impl.1} parent=0 // pred_region
    _
  $region17: #{_net_forward_impl.1} parent=0 // pred_fallthru
    _
  // Predicated region
  $region18: #{_net_forward_impl.1} parent=0 // pred_check
    _
  $region19: #{_net_forward_impl.1} parent=0 // pred_check_branch
    %19 = sbr.rel (0) target = $region21
  $region20: #{_net_forward_impl.1} parent=0 // pred_region
    _
  $region21: #{_net_forward_impl.1} parent=0 // pred_fallthru
    _
  %v20 = vld [vmem:[%s0] sm:$0xff]
  %v21 = vld [vmem:[%s1] sm:$0xff]
  %v22 = vld [vmem:[%s1 + $0x8] sm:$0xff]
  %v23 = vld [vmem:[%s1 + $0x10] sm:$0xff]
  %v24 = vld [vmem:[%s1 + $0x18] sm:$0xff]
  %v25 = vld [vmem:[%s1 + $0x20] sm:$0xff]
  %v26 = vld [vmem:[%s1 + $0x28] sm:$0xff]
  %v27 = vld [vmem:[%s1 + $0x30] sm:$0xff]
  %v28 = vld [vmem:[%s2] sm:$0xff]
  %v29 = vld [vmem:[%s2 + $0x8] sm:$0xff]
  %v30 = vld [vmem:[%s2 + $0x10] sm:$0xff]
  %v31 = vld [vmem:[%s2 + $0x18] sm:$0xff]
  %v32 = vld [vmem:[%s2 + $0x20] sm:$0xff]
  %v33 = vld [vmem:[%s2 + $0x28] sm:$0xff]
  %v34 = vld [vmem:[%s2 + $0x30] sm:$0xff]
  %36 = vset.pattern.permute.xlu0 0
  %37 = vperm.xlu0 %36, %v28
  %v38 = vpop.permute.xlu0 %37
  %41 = vset.pattern.permute.xlu0 0
  %42 = vperm.xlu0 %41, %v29
  %v43 = vpop.permute.xlu0 %42
  %46 = vset.pattern.permute.xlu0 0
  %47 = vperm.xlu0 %46, %v30
  %v48 = vpop.permute.xlu0 %47
  %51 = vset.pattern.permute.xlu0 0
  %52 = vperm.xlu0 %51, %v31
  %v53 = vpop.permute.xlu0 %52
  %56 = vset.pattern.permute.xlu0 0
  %57 = vperm.xlu0 %56, %v32
  %v58 = vpop.permute.xlu0 %57
  %61 = vset.pattern.permute.xlu0 0
  %62 = vperm.xlu0 %61, %v33
  %v63 = vpop.permute.xlu0 %62
  %66 = vset.pattern.permute.xlu0 0
  %67 = vperm.xlu0 %66, %v34
  %v68 = vpop.permute.xlu0 %67
  %vm70 = vcmask 64512
  %v72 = vsel %vm70, %v21, 0
  %v75 = vsel %vm70, %v22, 0
  %v78 = vsel %vm70, %v23, 0
  %v81 = vsel %vm70, %v24, 0
  %v84 = vsel %vm70, %v25, 0
  %v87 = vsel %vm70, %v26, 0
  %v90 = vsel %vm70, %v27, 0
  %92 = vmatprep.subr.mxu0 0.0
  %93 = vmatpush1.msra.mxu0 0.0
  %94 = vmatprep.subr.mxu0 0.0
  %95 = vmatpush1.msra.mxu0 0.0
  %96 = vmatprep.subr.mxu0 0.0
  %97 = vmatpush1.msra.mxu0 0.0
  %98 = vmatprep.subr.mxu0 0.0
  %99 = vmatpush1.msra.mxu0 0.0
  %100 = vmatprep.subr.mxu0 0.0
  %101 = vmatpush1.msra.mxu0 0.0
  %102 = vmatprep.subr.mxu0 0.0
  %103 = vmatpush1.msra.mxu0 0.0
  %104 = vmatprep.subr.mxu0 0.0
  %105 = vmatpush1.msra.mxu0 0.0
  %106 = vmatprep.subr.mxu0 0.0
  %107 = vmatpush1.msra.mxu0 0.0
  %108 = vmatprep.subr.mxu0 0.0
  %109 = vmatpush1.msra.mxu0 0.0
  %110 = vmatprep.subr.mxu0 0.0
  %111 = vmatpush1.msra.mxu0 0.0
  %112 = vmatprep.subr.mxu0 0.0
  %113 = vmatpush1.msra.mxu0 0.0
  %114 = vmatprep.subr.mxu0 0.0
  %115 = vmatpush1.msra.mxu0 0.0
  %116 = vmatprep.subr.mxu0 0.0
  %117 = vmatpush1.msra.mxu0 0.0
  %118 = vmatprep.subr.mxu0 0.0
  %119 = vmatpush1.msra.mxu0 0.0
  %120 = vmatprep.subr.mxu0 0.0
  %121 = vmatpush1.msra.mxu0 0.0
  %122 = vmatprep.subr.mxu0 0.0
  %123 = vmatpush1.msra.mxu0 %v20
  %124 = vmatprep.subr.mxu0 0.0
  %125 = vmatpush2.msra.mxu0 0.0
  %126 = vmatprep.subr.mxu0 0.0
  %127 = vmatpush2.msra.mxu0 0.0
  %128 = vmatprep.subr.mxu0 0.0
  %129 = vmatpush2.msra.mxu0 0.0
  %130 = vmatprep.subr.mxu0 0.0
  %131 = vmatpush2.msra.mxu0 0.0
  %132 = vmatprep.subr.mxu0 0.0
  %133 = vmatpush2.msra.mxu0 0.0
  %134 = vmatprep.subr.mxu0 0.0
  %135 = vmatpush2.msra.mxu0 0.0
  %136 = vmatprep.subr.mxu0 0.0
  %137 = vmatpush2.msra.mxu0 0.0
  %138 = vmatprep.subr.mxu0 0.0
  %139 = vmatpush2.msra.mxu0 0.0
  %140 = vmatprep.subr.mxu0 0.0
  %141 = vmatpush2.msra.mxu0 0.0
  %142 = vmatprep.subr.mxu0 0.0
  %143 = vmatpush2.msra.mxu0 0.0
  %144 = vmatprep.subr.mxu0 0.0
  %145 = vmatpush2.msra.mxu0 0.0
  %146 = vmatprep.subr.mxu0 0.0
  %147 = vmatpush2.msra.mxu0 0.0
  %148 = vmatprep.subr.mxu0 0.0
  %149 = vmatpush2.msra.mxu0 0.0
  %150 = vmatprep.subr.mxu0 0.0
  %151 = vmatpush2.msra.mxu0 0.0
  %152 = vmatprep.subr.mxu0 0.0
  %153 = vmatpush2.msra.mxu0 0.0
  %154 = vmatprep.subr.mxu0 0.0
  %155 = vmatpush2.msra.mxu0 0.0
  %156 = vmatprep.mubr.f32.mxu0 0.0
  %157 = vmatmul.mubr.f32.gmra.mxu0 %v72
  %v158 = vpop.f32.mrf.mxu0
  %v159 = vadd.f32 %v38, %v158
  %v160 = vpop.f32.mrf.mxu0
  %161 = vmatprep.mubr.f32.mxu0 0.0
  %162 = vmatmul.mubr.f32.gmra.mxu0 %v75
  %v163 = vpop.f32.mrf.mxu0
  %v164 = vadd.f32 %v43, %v163
  %v165 = vpop.f32.mrf.mxu0
  %166 = vmatprep.mubr.f32.mxu0 0.0
  %167 = vmatmul.mubr.f32.gmra.mxu0 %v78
  %v168 = vpop.f32.mrf.mxu0
  %v169 = vadd.f32 %v48, %v168
  %v170 = vpop.f32.mrf.mxu0
  %171 = vmatprep.mubr.f32.mxu0 0.0
  %172 = vmatmul.mubr.f32.gmra.mxu0 %v81
  %v173 = vpop.f32.mrf.mxu0
  %v174 = vadd.f32 %v53, %v173
  %v175 = vpop.f32.mrf.mxu0
  %176 = vmatprep.mubr.f32.mxu0 0.0
  %177 = vmatmul.mubr.f32.gmra.mxu0 %v84
  %v178 = vpop.f32.mrf.mxu0
  %v179 = vadd.f32 %v58, %v178
  %v180 = vpop.f32.mrf.mxu0
  %181 = vmatprep.mubr.f32.mxu0 0.0
  %182 = vmatmul.mubr.f32.gmra.mxu0 %v87
  %v183 = vpop.f32.mrf.mxu0
  %v184 = vadd.f32 %v63, %v183
  %v185 = vpop.f32.mrf.mxu0
  %186 = vmatprep.mubr.f32.mxu0 0.0
  %187 = vmatmul.mubr.f32.gmra.mxu0 %v90
  %v188 = vpop.f32.mrf.mxu0
  %v189 = vadd.f32 %v68, %v188
  %v190 = vpop.f32.mrf.mxu0
  %191 = vdwg.mxu0
  %v192 = vtanh.pop %v159
  %v193 = vtanh.pop %v164
  %v194 = vtanh.pop %v169
  %v195 = vtanh.pop %v174
  %v196 = vtanh.pop %v179
  %v197 = vtanh.pop %v184
  %v198 = vtanh.pop %v189
  %v199 = vld [vmem:[%s3] sm:$0xff]
  %v200 = vld [vmem:[%s4] sm:$0xff]
  %202 = vset.pattern.permute.xlu0 0
  %203 = vperm.xlu0 %202, %v200
  %v204 = vpop.permute.xlu0 %203
  %vm206 = vcmask 457728
  %v208 = vsel %vm206, %v199, 0
  %210 = vmatprep.subr.mxu0 0.0
  %211 = vmatpush1.msra.mxu0 0.0
  %212 = vmatprep.subr.mxu0 0.0
  %213 = vmatpush1.msra.mxu0 0.0
  %214 = vmatprep.subr.mxu0 0.0
  %215 = vmatpush1.msra.mxu0 0.0
  %216 = vmatprep.subr.mxu0 0.0
  %217 = vmatpush1.msra.mxu0 0.0
  %218 = vmatprep.subr.mxu0 0.0
  %219 = vmatpush1.msra.mxu0 0.0
  %220 = vmatprep.subr.mxu0 0.0
  %221 = vmatpush1.msra.mxu0 0.0
  %222 = vmatprep.subr.mxu0 0.0
  %223 = vmatpush1.msra.mxu0 0.0
  %224 = vmatprep.subr.mxu0 0.0
  %225 = vmatpush1.msra.mxu0 0.0
  %226 = vmatprep.subr.mxu0 0.0
  %227 = vmatpush1.msra.mxu0 0.0
  %228 = vmatprep.subr.mxu0 0.0
  %229 = vmatpush1.msra.mxu0 %v198
  %230 = vmatprep.subr.mxu0 0.0
  %231 = vmatpush1.msra.mxu0 %v197
  %232 = vmatprep.subr.mxu0 0.0
  %233 = vmatpush1.msra.mxu0 %v196
  %234 = vmatprep.subr.mxu0 0.0
  %235 = vmatpush1.msra.mxu0 %v195
  %236 = vmatprep.subr.mxu0 0.0
  %237 = vmatpush1.msra.mxu0 %v194
  %238 = vmatprep.subr.mxu0 0.0
  %239 = vmatpush1.msra.mxu0 %v193
  %240 = vmatprep.subr.mxu0 0.0
  %241 = vmatpush1.msra.mxu0 %v192
  %242 = vmatprep.subr.mxu0 0.0
  %243 = vmatpush2.msra.mxu0 0.0
  %244 = vmatprep.subr.mxu0 0.0
  %245 = vmatpush2.msra.mxu0 0.0
  %246 = vmatprep.subr.mxu0 0.0
  %247 = vmatpush2.msra.mxu0 0.0
  %248 = vmatprep.subr.mxu0 0.0
  %249 = vmatpush2.msra.mxu0 0.0
  %250 = vmatprep.subr.mxu0 0.0
  %251 = vmatpush2.msra.mxu0 0.0
  %252 = vmatprep.subr.mxu0 0.0
  %253 = vmatpush2.msra.mxu0 0.0
  %254 = vmatprep.subr.mxu0 0.0
  %255 = vmatpush2.msra.mxu0 0.0
  %256 = vmatprep.subr.mxu0 0.0
  %257 = vmatpush2.msra.mxu0 0.0
  %258 = vmatprep.subr.mxu0 0.0
  %259 = vmatpush2.msra.mxu0 0.0
  %260 = vmatprep.subr.mxu0 0.0
  %261 = vmatpush2.msra.mxu0 0.0
  %262 = vmatprep.subr.mxu0 0.0
  %263 = vmatpush2.msra.mxu0 0.0
  %264 = vmatprep.subr.mxu0 0.0
  %265 = vmatpush2.msra.mxu0 0.0
  %266 = vmatprep.subr.mxu0 0.0
  %267 = vmatpush2.msra.mxu0 0.0
  %268 = vmatprep.subr.mxu0 0.0
  %269 = vmatpush2.msra.mxu0 0.0
  %270 = vmatprep.subr.mxu0 0.0
  %271 = vmatpush2.msra.mxu0 0.0
  %272 = vmatprep.subr.mxu0 0.0
  %273 = vmatpush2.msra.mxu0 0.0
  %274 = vmatprep.mubr.f32.mxu0 0.0
  %275 = vmatmul.mubr.f32.gmra.mxu0 %v208
  %v276 = vpop.f32.mrf.mxu0
  %v277 = vadd.f32 %v204, %v276
  %v278 = vpop.f32.mrf.mxu0
  %279 = vdwg.mxu0
  %280 = vst [vmem:[%s5] sm:$0xff] %v277
  // Predicated region
  $region22: #{_net_forward_impl.1} parent=0 // pred_check
    _
  $region23: #{_net_forward_impl.1} parent=0 // pred_check_branch
    %282 = sbr.rel (0) target = $region25
  $region24: #{_net_forward_impl.1} parent=0 // pred_region
    _
  $region25: #{_net_forward_impl.1} parent=0 // pred_fallthru
    _
  // Predicated region
  $region26: #{_net_forward_impl.1} parent=0 // pred_check
    _
  $region27: #{_net_forward_impl.1} parent=0 // pred_check_branch
    %284 = sbr.rel (0) target = $region29
  $region28: #{_net_forward_impl.1} parent=0 // pred_region
    _
  $region29: #{_net_forward_impl.1} parent=0 // pred_fallthru
    _

</llo_original>
